<compile_context>
chip_gen: v7x
topology: tpu7x:2x2x1
jax: 0.10.0
libtpu: 0.0.40
codegen_flags: <defaults>
</compile_context>

<pallas_src>
import math

import jax
import jax.numpy as jnp
from jax.experimental import pallas as pl
from jax.experimental.pallas import tpu as pltpu

_MIB = 1024 * 1024


def _round_up(a: int, b: int) -> int:
    return ((a + b - 1) // b) * b


def _vmem_capacity_bytes() -> int:
    """Best-effort per-core VMEM capacity query; conservative fallback (v7x = 64 MiB)."""
    try:
        cap = getattr(pltpu.get_tpu_info(), "vmem_capacity_bytes", None)
        if cap:
            return int(cap)
    except Exception:
        pass
    return 64 * _MIB


def _linear_kernel(x_ref, w_ref, b_ref, o_ref):
    # x_ref: (tm, K)  input row tile in its ORIGINAL dtype (cast to bf16 here, in VMEM)
    # w_ref: (K, tn)  bf16 column tile of the pre-transposed weight
    # b_ref: (1, tn)  f32 bias slice
    # o_ref: (tm, tn) output tile
    x = x_ref[...].astype(w_ref.dtype)
    acc = jnp.dot(x, w_ref[...], preferred_element_type=jnp.float32)
    o_ref[...] = (acc + b_ref[...]).astype(o_ref.dtype)


def prepare_att_params(weight, bias, *, compute_dtype=jnp.bfloat16, lane=128):
    """One-time parameter preparation (do NOT call per forward pass).

    weight: [out_channels, in_channels]  (PyTorch Linear layout)
    bias:   [out_channels]
    Returns:
      w_kn:     [in_channels, N_pad] in `compute_dtype` (transposed, lane-padded)
      bias_row: [1, N_pad] float32
    """
    n, k = weight.shape
    n_pad = _round_up(n, lane)                  # lane-dense, unmasked output stores
    w_kn = weight.T                             # [K, N] -- transposed once, here
    b = bias
    if n_pad != n:
        w_kn = jnp.pad(w_kn, ((0, 0), (0, n_pad - n)))
        b = jnp.pad(b, (0, n_pad - n))
    # TODO(synk): optionally pad K to a multiple of 128/256 (and int8/fp8-quantize the
    # weight per generation); skipped here because it would also require K-padded
    # activations from the caller (an extra wrapper-side pass over x otherwise).
    return w_kn.astype(compute_dtype), b.reshape(1, n_pad).astype(jnp.float32)


def att_forward(x, w_kn, bias_row, out_channels, *, tile_m=None, tile_n=None,
                out_dtype=None, keep_padded_output=False):
    """Pallas implementation of Att.forward (a Linear layer).

    Args:
      x:            [..., in_channels]  (float32 or bfloat16; NOT cast in the wrapper)
      w_kn:         [in_channels, N_pad]  prepared weight (see prepare_att_params)
      bias_row:     [1, N_pad] float32 prepared bias
      out_channels: true (unpadded) number of output channels
      out_dtype:    output dtype (default x.dtype; pass jnp.bfloat16 to halve writes)
      keep_padded_output: return [..., N_pad] and skip the strip slice (perf option)
    """
    *lead, k = x.shape
    k_w, n_pad = w_kn.shape
    assert k == k_w, f"in_channels mismatch: x has {k}, weight has {k_w}"

    m = 1
    for d in lead:
        m *= d
    x2 = x.reshape(m, k)                         # view only; no dtype cast here

    out_dtype = x.dtype if out_dtype is None else jnp.dtype(out_dtype)
    x_eb = x2.dtype.itemsize
    w_eb = w_kn.dtype.itemsize
    o_eb = jnp.dtype(out_dtype).itemsize
    b_eb = bias_row.dtype.itemsize

    # ---- generation-aware VMEM budget -------------------------------------
    vmem_cap = _vmem_capacity_bytes()
    vmem_limit = max(32 * _MIB, min(vmem_cap - 16 * _MIB, 112 * _MIB))
    budget = vmem_limit - 4 * _MIB               # headroom for Mosaic internal scratch

    # ---- tile selection ----------------------------------------------------
    # Prefer keeping the whole weight resident (constant block index => DMA'd once).
    if tile_n is None:
        tile_n = n_pad if (2 * k * n_pad * w_eb) <= budget // 2 else 512
    tn = min(_round_up(tile_n, 128), n_pad)

    if tile_m is None:
        tile_m = 1024 if vmem_cap >= 96 * _MIB else 512   # v5e/v6e vs v7x default
    tm = min(tile_m, _round_up(m, 16))           # bf16 packs (16,128) per vreg

    def footprint(tm_, tn_):                     # double-buffered per-step VMEM bytes
        return (2 * tm_ * k * x_eb + 2 * k * tn_ * w_eb
                + 2 * tm_ * tn_ * o_eb + 2 * tn_ * b_eb)

    while footprint(tm, tn) > budget and tm > 16:
        tm = max(16, tm // 2)
    while footprint(tm, tn) > budget and tn > 128:
        tn = max(128, _round_up(tn // 2, 128))

    gm, gn = pl.cdiv(m, tm), pl.cdiv(n_pad, tn)

    # ---- grid order: re-fetch the cheaper operand --------------------------
    w_restream = gm * k * n_pad * w_eb           # weight streamed once per row tile
    x_restream = gn * m * k * x_eb               # x streamed once per column tile
    if gn == 1 or w_restream <= x_restream:
        grid = (gm, gn)                          # i (rows) outer, j (cols) inner
        x_map = lambda i, j: (i, 0)
        w_map = lambda i, j: (0, j)
        b_map = lambda i, j: (0, j)
        o_map = lambda i, j: (i, j)
        read_bytes = m * k * x_eb + w_restream
    else:
        grid = (gn, gm)                          # j outer: weight fetched once
        x_map = lambda j, i: (i, 0)
        w_map = lambda j, i: (0, j)
        b_map = lambda j, i: (0, j)
        o_map = lambda j, i: (i, j)
        read_bytes = k * n_pad * w_eb + x_restream

    cost = pl.CostEstimate(
        flops=2 * m * k * n_pad,
        transcendentals=0,
        bytes_accessed=int(read_bytes + m * n_pad * o_eb + n_pad * b_eb),
    )

    out = pl.pallas_call(
        _linear_kernel,
        out_shape=jax.ShapeDtypeStruct((m, n_pad), out_dtype),
        grid=grid,
        in_specs=[
            pl.BlockSpec((tm, k), x_map),        # x row tile (full K, original dtype)
            pl.BlockSpec((k, tn), w_map),        # bf16 weight column tile
            pl.BlockSpec((1, tn), b_map),        # f32 bias slice
        ],
        out_specs=pl.BlockSpec((tm, tn), o_map),
        compiler_params=pltpu.CompilerParams(
            # Both axes are independent -> shardable across v7x's two TensorCores.
            dimension_semantics=("parallel", "parallel"),
            vmem_limit_bytes=int(vmem_limit),
        ),
        cost_estimate=cost,
    )(x2, w_kn, bias_row)

    if keep_padded_output:
        # Perf option: downstream consumers must mask/ignore columns >= out_channels.
        return out.reshape(*lead, n_pad)
    if n_pad != out_channels:
        out = out[:, :out_channels]
    return out.reshape(*lead, out_channels)


def init_att_params(key, in_channels, out_channels):
    """Deterministic parameter init matching Att.reset_parameters():
    xavier_uniform_ on the linear weight, zeros on bias (PyTorch [N, K] layout)."""
    bound = math.sqrt(6.0 / (in_channels + out_channels))
    weight = jax.random.uniform(
        key, (out_channels, in_channels), minval=-bound, maxval=bound,
        dtype=jnp.float32)
    bias = jnp.zeros((out_channels,), dtype=jnp.float32)
    return weight, bias


if __name__ == "__main__":
    in_channels = 32
    out_channels = 32
    batch, seq = 2, 8

    key = jax.random.PRNGKey(0)
    kx, kw = jax.random.split(key)

    x = jax.random.normal(kx, (batch, seq, in_channels), dtype=jnp.float32)
    weight, bias = init_att_params(kw, in_channels, out_channels)

    # One-time prep: transpose -> [K, N], pad N to a multiple of 128, cast to bf16.
    w_kn, bias_row = prepare_att_params(weight, bias)

    y = att_forward(x, w_kn, bias_row, out_channels)
    y = jax.block_until_ready(y)

    # Sanity check against the exact f32 reference (tolerance covers bf16 operands).
    y_ref = x @ weight.T + bias
    assert y.shape == (batch, seq, out_channels)
    assert y.dtype == x.dtype
    assert jnp.allclose(y, y_ref, atol=1e-1, rtol=1e-2), float(
        jnp.max(jnp.abs(y - y_ref)))

    print("KERNEL_OK")
</pallas_src>

<mosaic_0001>
module attributes {stable_mosaic.version = 11 : i64} {
  func.func @_linear_kernel(%arg0: i32, %arg1: i32, %arg2: memref<16x32xf32, #tpu.memory_space<vmem>>, %arg3: memref<32x128xbf16, #tpu.memory_space<vmem>>, %arg4: memref<1x128xf32, #tpu.memory_space<vmem>>, %arg5: memref<16x128xf32, #tpu.memory_space<vmem>>) attributes {dimension_semantics = [#tpu.dimension_semantics<parallel>, #tpu.dimension_semantics<parallel>], iteration_bounds = array<i64: 1, 1>, scalar_prefetch = 0 : i64, scratch_operands = 0 : i64, tpu.core_type = #tpu.core_type<tc>, window_params = [{transform_indices = @transform_0, window_bounds = array<i64: 16, 32>}, {transform_indices = @transform_1, window_bounds = array<i64: 32, 128>}, {transform_indices = @transform_2, window_bounds = array<i64: 1, 128>}, {transform_indices = @transform_3, window_bounds = array<i64: 16, 128>}]} {
    %c0 = arith.constant 0 : index
    %c0_0 = arith.constant 0 : index
    %0 = vector.load %arg2[%c0, %c0_0] : memref<16x32xf32, #tpu.memory_space<vmem>>, vector<16x32xf32>
    %1 = arith.truncf %0 : vector<16x32xf32> to vector<16x32xbf16>
    %c0_1 = arith.constant 0 : index
    %c0_2 = arith.constant 0 : index
    %2 = vector.load %arg3[%c0_1, %c0_2] : memref<32x128xbf16, #tpu.memory_space<vmem>>, vector<32x128xbf16>
    %cst = arith.constant dense<0.000000e+00> : vector<16x128xf32>
    %3 = tpu.matmul %1, %2, %cst {dimension_numbers = #tpu.dot_dimension_numbers<[1], [0], [0], [1], [0, 0, 1, 1], [], []>} : vector<16x32xbf16>, vector<32x128xbf16>, vector<16x128xf32> -> vector<16x128xf32>
    %c0_3 = arith.constant 0 : index
    %c0_4 = arith.constant 0 : index
    %4 = vector.load %arg4[%c0_3, %c0_4] : memref<1x128xf32, #tpu.memory_space<vmem>>, vector<1x128xf32>
    %5 = vector.broadcast %4 : vector<1x128xf32> to vector<16x128xf32>
    %6 = arith.addf %3, %5 : vector<16x128xf32>
    %c0_5 = arith.constant 0 : index
    %c0_6 = arith.constant 0 : index
    %7 = vector.load %arg5[%c0_5, %c0_6] : memref<16x128xf32, #tpu.memory_space<vmem>>, vector<16x128xf32>
    tpu.vector_store %arg5[%c0_5, %c0_6], %6 {strides = array<i32>} : memref<16x128xf32, #tpu.memory_space<vmem>>, vector<16x128xf32>,
    return
  }
  func.func @transform_0(%arg0: i32, %arg1: i32) -> (i32, i32) {
    %c0_i32 = arith.constant 0 : i32
    %c0_i32_0 = arith.constant 0 : i32
    return %arg0, %c0_i32 : i32, i32
  }
  func.func @transform_1(%arg0: i32, %arg1: i32) -> (i32, i32) {
    %c0_i32 = arith.constant 0 : i32
    %c0_i32_0 = arith.constant 0 : i32
    return %c0_i32, %arg1 : i32, i32
  }
  func.func @transform_2(%arg0: i32, %arg1: i32) -> (i32, i32) {
    %c0_i32 = arith.constant 0 : i32
    %c0_i32_0 = arith.constant 0 : i32
    return %c0_i32, %arg1 : i32, i32
  }
  func.func @transform_3(%arg0: i32, %arg1: i32) -> (i32, i32) {
    %c0_i32 = arith.constant 0 : i32
    return %arg0, %arg1 : i32, i32
  }
}

</mosaic_0001>

<llo_original>
// kernel: tpu_custom_call.1
$region0: #{tpu_custom_call.1}
  #allocation0 [shape = 'u32[]', space=smem, size = 0x4, offset = 0x4, fixed_abs, tag = 'smem constant byte address 0x4 - core index']
  #allocation1 [shape = 'u32[144,128]{1,0:T(1,128)}', space=vmem, size = 0x12000, scoped, tag = 'internal scratch']
  %s0 = inlined_call_operand.hbm [shape: f32[16,32], index: 0, kind: input, shape index: {}]
  %s1 = inlined_call_operand.hbm [shape: bf16[32,128], index: 1, kind: input, shape index: {}]
  %s2 = inlined_call_operand.vmem [shape: f32[1,128], index: 2, kind: input, shape index: {}]
  %s3 = inlined_call_operand.hbm [shape: f32[16,128], index: 3, kind: output, shape index: {}]
  %s4 = sld [smem:[#allocation0]]
  $region30: #{tpu_custom_call.1} parent=0
    _
  %s6 = ssub.s32 1, %s4
  %s7 = scalar_select 0, %s6, %s4
  $region1: #{tpu_custom_call.1} parent=0
    #allocation2 [shape = 'u8[8192]{0}', space=vmem, size = 0x2000, scoped, tag = 'input window, operand 0, single buffered']
    #allocation3 [shape = 's32[1]{0}', space=sflag, size = 0x4, scoped, tag = 'scoped memory for tpu_custom_call.1']
    #allocation4 [shape = 's32[1]{0}', space=sflag, size = 0x4, scoped, tag = 'scoped memory for tpu_custom_call.1']
    #allocation5 [shape = 'u8[8192]{0}', space=vmem, size = 0x2000, scoped, tag = 'input window, operand 1, single buffered']
    #allocation6 [shape = 's32[1]{0}', space=sflag, size = 0x4, scoped, tag = 'scoped memory for tpu_custom_call.1']
    #allocation7 [shape = 'u8[8192]{0}', space=vmem, size = 0x2000, scoped, tag = 'output window, operand 0, single buffered']
    %8 = vsyncpa [#allocation3], 0
    %9 = vsyncpa [#allocation6], 0
    %10 = vsyncpa [#allocation4], 0
    // Predicated region
    $region2: #{tpu_custom_call.1} parent=1 // pred_check
      _
    $region3: #{tpu_custom_call.1} parent=1 // pred_check_branch
      %12 = sbr.rel (0) target = $region5
    $region4: #{tpu_custom_call.1} parent=1 // pred_region
      %s14 = ssub.s32 256, 256
      %15 = vsyncadd [#allocation3], %s14
      %s16 = sshll.u32 [#allocation2], 4
      %s17 = int_to_ptr.vmem [resolvable:$true] %s16
      %22 = dma.hbm_to_vmem [thread:$0]  %s0, 256, %s17, [#allocation3], 128, 128, 8
    $region5: #{tpu_custom_call.1} parent=1 // pred_fallthru
      _
    // Predicated region
    $region6: #{tpu_custom_call.1} parent=1 // pred_check
      _
    $region7: #{tpu_custom_call.1} parent=1 // pred_check_branch
      %24 = sbr.rel (0) target = $region9
    $region8: #{tpu_custom_call.1} parent=1 // pred_region
      %s26 = ssub.s32 256, 256
      %27 = vsyncadd [#allocation6], %s26
      %s28 = sshll.u32 [#allocation5], 4
      %s29 = int_to_ptr.vmem [resolvable:$true] %s28
      %34 = dma.hbm_to_vmem [thread:$0]  %s1, 256, %s29, [#allocation6], 64, 64, 4
    $region9: #{tpu_custom_call.1} parent=1 // pred_fallthru
      _
    // Predicated region
    $region10: #{tpu_custom_call.1} parent=1 // pred_check
      _
    $region11: #{tpu_custom_call.1} parent=1 // pred_check_branch
      %36 = sbr.rel (0) target = $region13
    $region12: #{tpu_custom_call.1} parent=1 // pred_region
      _
    $region13: #{tpu_custom_call.1} parent=1 // pred_fallthru
      _
    // Predicated region
    $region14: #{tpu_custom_call.1} parent=1 // pred_check
      _
    $region15: #{tpu_custom_call.1} parent=1 // pred_check_branch
      %38 = sbr.rel (0) target = $region17
    $region16: #{tpu_custom_call.1} parent=1 // pred_region
      %39 = dma.done [#allocation3], 256
    $region17: #{tpu_custom_call.1} parent=1 // pred_fallthru
      _
    // Predicated region
    $region18: #{tpu_custom_call.1} parent=1 // pred_check
      _
    $region19: #{tpu_custom_call.1} parent=1 // pred_check_branch
      %41 = sbr.rel (0) target = $region21
    $region20: #{tpu_custom_call.1} parent=1 // pred_region
      %42 = dma.done [#allocation6], 256
    $region21: #{tpu_custom_call.1} parent=1 // pred_fallthru
      _
    %v44 = vld [vmem:[#allocation2] sm:$0xff]
    %v45 = vld [vmem:[#allocation2 + $0x8] sm:$0xff]
    %v46 = vpack.c.bf16 %v45, %v44
    %v47 = vld [vmem:[#allocation5] sm:$0xf]
    %v48 = vld [vmem:[#allocation5 + $0x4] sm:$0xf]
    %v49 = vld [vmem:[#allocation5 + $0x8] sm:$0xf]
    %v50 = vld [vmem:[#allocation5 + $0xc] sm:$0xf]
    %v51 = vld [vmem:[%s2] sm:$0x1]
    %v53 = vlaneseq
    %v54 = vshrl.u32 %v53, 7
    %v55 = vsub.s32 0, %v54
    %v56 = vrot.slane %v51, %v55
    %v62 = vunpack.c.l.b16 %v47
    %v63 = vunpack.c.l.b16 %v48
    %v64 = vunpack.c.l.b16 %v49
    %v65 = vunpack.c.l.b16 %v50
    %v66 = vpack.c.b16 %v63, %v62
    %v67 = vpack.c.b16 %v65, %v64
    %vm70 = vcmask 261120
    %v72 = vsel %vm70, %v46, 0
    %74 = vmatprep.subr.bf16.mxu0 0
    %75 = vmatpush1.bf16.msra.mxu0 %v66
    %76 = vmatprep.subr.bf16.mxu0 0
    %77 = vmatpush1.bf16.msra.mxu0 %v67
    %78 = vmatprep.subr.bf16.mxu0 0
    %79 = vmatpush1.bf16.msra.mxu0 0
    %80 = vmatprep.subr.bf16.mxu0 0
    %81 = vmatpush1.bf16.msra.mxu0 0
    %82 = vmatprep.subr.bf16.mxu0 0
    %83 = vmatpush1.bf16.msra.mxu0 0
    %84 = vmatprep.subr.bf16.mxu0 0
    %85 = vmatpush1.bf16.msra.mxu0 0
    %86 = vmatprep.subr.bf16.mxu0 0
    %87 = vmatpush1.bf16.msra.mxu0 0
    %88 = vmatprep.subr.bf16.mxu0 0
    %89 = vmatpush1.bf16.msra.mxu0 0
    %90 = vmatprep.subr.bf16.mxu0 0
    %91 = vmatpush1.bf16.msra.mxu0 0
    %92 = vmatprep.subr.bf16.mxu0 0
    %93 = vmatpush1.bf16.msra.mxu0 0
    %94 = vmatprep.subr.bf16.mxu0 0
    %95 = vmatpush1.bf16.msra.mxu0 0
    %96 = vmatprep.subr.bf16.mxu0 0
    %97 = vmatpush1.bf16.msra.mxu0 0
    %98 = vmatprep.subr.bf16.mxu0 0
    %99 = vmatpush1.bf16.msra.mxu0 0
    %100 = vmatprep.subr.bf16.mxu0 0
    %101 = vmatpush1.bf16.msra.mxu0 0
    %102 = vmatprep.subr.bf16.mxu0 0
    %103 = vmatpush1.bf16.msra.mxu0 0
    %104 = vmatprep.subr.bf16.mxu0 0
    %105 = vmatpush1.bf16.msra.mxu0 0
    %106 = vmatprep.mubr.bf16.mxu0 0
    %107 = vmatmul.mubr.bf16.gmra.mrb[0].mxu0 %v72
    %v108 = vpop.f32.mrb[0].mxu0
    %v109 = vadd.f32 %v56, %v108
    %v110 = vpop.f32.mrb[0].mxu0
    %v111 = vpop.f32.mrb[0].mxu0
    %v112 = vadd.f32 %v56, %v111
    %v113 = vpop.f32.mrb[0].mxu0
    %114 = vdwg.mxu0
    %115 = vst [vmem:[#allocation7] sm:$0xff] %v109
    %116 = vst [vmem:[#allocation7 + $0x8] sm:$0xff] %v112
    // Predicated region
    $region22: #{tpu_custom_call.1} parent=1 // pred_check
      _
    $region23: #{tpu_custom_call.1} parent=1 // pred_check_branch
      %118 = sbr.rel (0) target = $region25
    $region24: #{tpu_custom_call.1} parent=1 // pred_region
      %s120 = ssub.s32 256, 256
      %121 = vsyncadd [#allocation4], %s120
      %s122 = sshll.u32 [#allocation7], 4
      %s123 = int_to_ptr.vmem [resolvable:$true] %s122
      %128 = dma.vmem_to_hbm [thread:$0]  %s123, 256, %s3, [#allocation4], 128, 128, 8
    $region25: #{tpu_custom_call.1} parent=1 // pred_fallthru
      _
    // Predicated region
    $region26: #{tpu_custom_call.1} parent=1 // pred_check
      _
    $region27: #{tpu_custom_call.1} parent=1 // pred_check_branch
      %130 = sbr.rel (0) target = $region29
    $region28: #{tpu_custom_call.1} parent=1 // pred_region
      %131 = dma.done [#allocation4], 256
    $region29: #{tpu_custom_call.1} parent=1 // pred_fallthru
      _
    %132 = vsyncpa [#allocation3], 1
    %133 = vsyncpa [#allocation6], 1
    %134 = vsyncpa [#allocation4], 1

</llo_original>
